<compile_context>
chip_gen: v5e
topology: v5e:2x2
jax: 0.10.0
libtpu: 0.0.40
codegen_flags: <defaults>
</compile_context>

<pallas_src>
import jax
import jax.numpy as jnp
from jax.experimental import pallas as pl
from jax.experimental.pallas import tpu as pltpu


def _round_up(x, m):
    return ((x + m - 1) // m) * m


def linear_relu_kernel(x_ref, wt_ref, b_ref, o_ref, acc_ref):
    # x_ref: (tm, tk) bf16   wt_ref: (tk, tn) bf16   b_ref: (1, tn) f32
    # o_ref: (tm, tn) f32    acc_ref: (tm, tn) f32 scratch
    k = pl.program_id(2)

    @pl.when(k == 0)
    def _():
        acc_ref[...] = jnp.zeros_like(acc_ref)

    acc_ref[...] += jnp.dot(
        x_ref[...], wt_ref[...], preferred_element_type=jnp.float32
    )

    @pl.when(k == pl.num_programs(2) - 1)
    def _():
        # Bias-add + relu epilogue in f32, single unmasked store per tile.
        o_ref[...] = jnp.maximum(acc_ref[...] + b_ref[...], 0.0).astype(o_ref.dtype)


def _vmem_budget_bytes():
    """Conservative per-kernel VMEM budget; v7x (64 MiB VMEM) gets less."""
    try:
        cap = pltpu.get_tpu_info().vmem_capacity_bytes
        return min(cap // 4, 24 * 1024 * 1024)
    except Exception:
        return 16 * 1024 * 1024


def _tile_footprint(tm, tn, tk):
    # Double-buffered input/output tiles + single-buffered f32 accumulator.
    return (
        2 * (tm * tk * 2 + tk * tn * 2 + tn * 4 + tm * tn * 4)  # x, w, b, out
        + tm * tn * 4                                            # acc scratch
    )


def activ_linear(x, wt, bias2d, *, tm=None, tn=None, tk=None):
    """relu(x @ wt + bias) with wt already (K, N) bf16 and bias (1, N) f32."""
    M, K = x.shape
    K2, N = wt.shape
    assert K == K2

    # --- tile selection -----------------------------------------------------
    if tn is None:
        tn = min(_round_up(N, 128), 512)          # lane-dense output tiles
    if tm is None:
        tm = min(_round_up(M, 8), 512)            # large row tiles
    if tk is None:
        tk = min(_round_up(K, 128), 512)          # reduction tiles

    # Shrink until double-buffered footprint fits the per-chip budget.
    budget = _vmem_budget_bytes()
    while _tile_footprint(tm, tn, tk) > budget:
        if tk > 128:
            tk -= 128
        elif tn > 128:
            tn -= 128
        elif tm > 8:
            tm = max(8, _round_up(tm // 2, 8))
        else:
            break

    # Keep >=2 parallel grid steps when possible (both v7x TensorCores busy).
    if pl.cdiv(M, tm) * pl.cdiv(N, tn) < 2 and tm >= 16:
        tm = max(8, _round_up(tm // 2, 8))

    # --- pad to tile multiples (padded region sliced off afterwards) ---------
    Mp, Np, Kp = _round_up(M, tm), _round_up(N, tn), _round_up(K, tk)
    xb = x.astype(jnp.bfloat16)
    if (Mp, Kp) != (M, K):
        xb = jnp.pad(xb, ((0, Mp - M), (0, Kp - K)))
    wtp, bp = wt, bias2d
    if (Kp, Np) != (K, N):
        wtp = jnp.pad(wt, ((0, Kp - K), (0, Np - N)))
        bp = jnp.pad(bias2d, ((0, 0), (0, Np - N)))

    grid = (Mp // tm, Np // tn, Kp // tk)
    cost = pl.CostEstimate(
        flops=2 * Mp * Np * Kp,
        transcendentals=0,
        bytes_accessed=xb.size * 2 + wtp.size * 2 + bp.size * 4 + Mp * Np * 4,
    )

    out = pl.pallas_call(
        linear_relu_kernel,
        out_shape=jax.ShapeDtypeStruct((Mp, Np), jnp.float32),
        grid_spec=pltpu.PrefetchScalarGridSpec(
            num_scalar_prefetch=0,
            grid=grid,
            in_specs=[
                pl.BlockSpec((tm, tk), lambda i, j, k: (i, k)),   # x tile
                pl.BlockSpec((tk, tn), lambda i, j, k: (k, j)),   # weight tile
                pl.BlockSpec((1, tn), lambda i, j, k: (0, j)),    # bias tile
            ],
            out_specs=pl.BlockSpec((tm, tn), lambda i, j, k: (i, j)),
            scratch_shapes=[pltpu.VMEM((tm, tn), jnp.float32)],
        ),
        compiler_params=pltpu.CompilerParams(
            dimension_semantics=("parallel", "parallel", "arbitrary"),
        ),
        cost_estimate=cost,
    )(xb, wtp, bp)

    if (Mp, Np) != (M, N):
        out = out[:M, :N]
    return out


class ActivLinear:
    """ActivModule(activ='relu') with an nn.Linear core, fused in Pallas.

    Weight re-layout (transpose -> (K, N)) and bf16 cast happen ONCE here,
    at parameter setup, not on every forward call.
    """

    def __init__(self, weight, bias):
        # weight: PyTorch layout (out_features, in_features)
        self.out_features, self.in_features = weight.shape
        self.wt = jnp.asarray(weight.T, dtype=jnp.bfloat16)            # (K, N)
        self.bias = jnp.asarray(bias, dtype=jnp.float32).reshape(1, -1)

    def __call__(self, x):
        return activ_linear(x, self.wt, self.bias)


if __name__ == "__main__":
    # Small, tile-aligned shapes implied by a Linear core.
    batch, in_features, out_features = 128, 256, 256

    key = jax.random.PRNGKey(0)
    kx, kw, kb = jax.random.split(key, 3)
    x = jax.random.normal(kx, (batch, in_features), dtype=jnp.float32)
    # Deterministic in-script parameter init (PyTorch-shaped weight (N, K)).
    weight = jax.random.normal(kw, (out_features, in_features), dtype=jnp.float32) * 0.1
    bias = jax.random.normal(kb, (out_features,), dtype=jnp.float32) * 0.1

    module = ActivLinear(weight, bias)      # one-time param re-layout
    out = jax.block_until_ready(module(x))

    # Reference (same bf16 operands, f32 accumulation) for relu(linear(x)).
    ref = jnp.maximum(
        jnp.dot(x.astype(jnp.bfloat16), weight.T.astype(jnp.bfloat16),
                preferred_element_type=jnp.float32) + bias,
        0.0,
    )
    assert out.shape == (batch, out_features)
    assert jnp.allclose(out, ref, atol=1e-3, rtol=1e-3), "mismatch vs reference"

    # TODO(synk): ActivModule's string->activation dispatch and arbitrary
    # user-supplied `core` modules have no single Pallas equivalent; only the
    # default relu + Linear-core instantiation is fused here.
    print("KERNEL_OK")
</pallas_src>

<mosaic_0001>
module attributes {stable_mosaic.version = 11 : i64} {
  func.func @linear_relu_kernel(%arg0: i32, %arg1: i32, %arg2: i32, %arg3: memref<64x256xbf16, #tpu.memory_space<vmem>>, %arg4: memref<256x256xbf16, #tpu.memory_space<vmem>>, %arg5: memref<1x256xf32, #tpu.memory_space<vmem>>, %arg6: memref<64x256xf32, #tpu.memory_space<vmem>>, %arg7: memref<64x256xf32, #tpu.memory_space<vmem>>) attributes {dimension_semantics = [#tpu.dimension_semantics<parallel>, #tpu.dimension_semantics<parallel>, #tpu.dimension_semantics<arbitrary>], iteration_bounds = array<i64: 2, 1, 1>, scalar_prefetch = 0 : i64, scratch_operands = 1 : i64, tpu.core_type = #tpu.core_type<tc>, window_params = [{transform_indices = @transform_0, window_bounds = array<i64: 64, 256>}, {transform_indices = @transform_1, window_bounds = array<i64: 256, 256>}, {transform_indices = @transform_2, window_bounds = array<i64: 1, 256>}, {transform_indices = @transform_3, window_bounds = array<i64: 64, 256>}]} {
    %c0_i32 = arith.constant 0 : i32
    %0 = arith.cmpi eq, %arg2, %c0_i32 : i32
    %1 = arith.extui %0 : i1 to i32
    %c0_i32_0 = arith.constant 0 : i32
    %2 = arith.cmpi ne, %1, %c0_i32_0 : i32
    scf.if %2 {
      %cst_10 = arith.constant 0.000000e+00 : f32
      %12 = vector.broadcast %cst_10 : f32 to vector<64x256xf32>
      %c0_11 = arith.constant 0 : index
      %c0_12 = arith.constant 0 : index
      %13 = vector.load %arg7[%c0_11, %c0_12] : memref<64x256xf32, #tpu.memory_space<vmem>>, vector<64x256xf32>
      tpu.vector_store %arg7[%c0_11, %c0_12], %12 {strides = array<i32>} : memref<64x256xf32, #tpu.memory_space<vmem>>, vector<64x256xf32>,
    } else {
    }
    %c0 = arith.constant 0 : index
    %c0_1 = arith.constant 0 : index
    %3 = vector.load %arg7[%c0, %c0_1] : memref<64x256xf32, #tpu.memory_space<vmem>>, vector<64x256xf32>
    %c0_2 = arith.constant 0 : index
    %c0_3 = arith.constant 0 : index
    %4 = vector.load %arg3[%c0_2, %c0_3] : memref<64x256xbf16, #tpu.memory_space<vmem>>, vector<64x256xbf16>
    %c0_4 = arith.constant 0 : index
    %c0_5 = arith.constant 0 : index
    %5 = vector.load %arg4[%c0_4, %c0_5] : memref<256x256xbf16, #tpu.memory_space<vmem>>, vector<256x256xbf16>
    %cst = arith.constant dense<0.000000e+00> : vector<64x256xf32>
    %6 = tpu.matmul %4, %5, %cst {dimension_numbers = #tpu.dot_dimension_numbers<[1], [0], [0], [1], [0, 0, 1, 1], [], []>} : vector<64x256xbf16>, vector<256x256xbf16>, vector<64x256xf32> -> vector<64x256xf32>
    %7 = arith.addf %3, %6 : vector<64x256xf32>
    %c0_6 = arith.constant 0 : index
    %c0_7 = arith.constant 0 : index
    %8 = vector.load %arg7[%c0_6, %c0_7] : memref<64x256xf32, #tpu.memory_space<vmem>>, vector<64x256xf32>
    tpu.vector_store %arg7[%c0_6, %c0_7], %7 {strides = array<i32>} : memref<64x256xf32, #tpu.memory_space<vmem>>, vector<64x256xf32>,
    %c0_i32_8 = arith.constant 0 : i32
    %9 = arith.cmpi eq, %arg2, %c0_i32_8 : i32
    %10 = arith.extui %9 : i1 to i32
    %c0_i32_9 = arith.constant 0 : i32
    %11 = arith.cmpi ne, %10, %c0_i32_9 : i32
    scf.if %11 {
      %c0_10 = arith.constant 0 : index
      %c0_11 = arith.constant 0 : index
      %12 = vector.load %arg7[%c0_10, %c0_11] : memref<64x256xf32, #tpu.memory_space<vmem>>, vector<64x256xf32>
      %c0_12 = arith.constant 0 : index
      %c0_13 = arith.constant 0 : index
      %13 = vector.load %arg5[%c0_12, %c0_13] : memref<1x256xf32, #tpu.memory_space<vmem>>, vector<1x256xf32>
      %14 = vector.broadcast %13 : vector<1x256xf32> to vector<64x256xf32>
      %15 = arith.addf %12, %14 : vector<64x256xf32>
      %cst_14 = arith.constant 0.000000e+00 : f32
      %16 = vector.broadcast %cst_14 : f32 to vector<64x256xf32>
      %17 = arith.maximumf %15, %16 : vector<64x256xf32>
      %c0_15 = arith.constant 0 : index
      %c0_16 = arith.constant 0 : index
      %18 = vector.load %arg6[%c0_15, %c0_16] : memref<64x256xf32, #tpu.memory_space<vmem>>, vector<64x256xf32>
      tpu.vector_store %arg6[%c0_15, %c0_16], %17 {strides = array<i32>} : memref<64x256xf32, #tpu.memory_space<vmem>>, vector<64x256xf32>,
    } else {
    }
    return
  }
  func.func @transform_0(%arg0: i32, %arg1: i32, %arg2: i32) -> (i32, i32) {
    %c0_i32 = arith.constant 0 : i32
    return %arg0, %arg2 : i32, i32
  }
  func.func @transform_1(%arg0: i32, %arg1: i32, %arg2: i32) -> (i32, i32) {
    %c0_i32 = arith.constant 0 : i32
    return %arg2, %arg1 : i32, i32
  }
  func.func @transform_2(%arg0: i32, %arg1: i32, %arg2: i32) -> (i32, i32) {
    %c0_i32 = arith.constant 0 : i32
    %c0_i32_0 = arith.constant 0 : i32
    return %c0_i32, %arg1 : i32, i32
  }
  func.func @transform_3(%arg0: i32, %arg1: i32, %arg2: i32) -> (i32, i32) {
    %c0_i32 = arith.constant 0 : i32
    return %arg0, %arg1 : i32, i32
  }
}

</mosaic_0001>

<llo_original>
// kernel: tpu_custom_call.1
$region0: #{tpu_custom_call.1}
  #allocation0 [shape = 'u32[]', space=smem, size = 0x4, offset = 0x4, fixed_abs, tag = 'smem constant byte address 0x4 - core index']
  #allocation1 [shape = 'u32[72,128]{1,0:T(1,128)}', space=vmem, size = 0x9000, scoped, tag = 'internal scratch']
  #allocation2 [shape = 'f32[64,256]{1,0:T(8,128)}', space=vmem, size = 0x10000, scoped, tag = 'scratch operand']
  %s0 = inlined_call_operand.hbm [shape: bf16[128,256], index: 0, kind: input, shape index: {}]
  %s1 = inlined_call_operand.hbm [shape: bf16[256,256], index: 1, kind: input, shape index: {}]
  %s2 = inlined_call_operand.hbm [shape: f32[1,256], index: 2, kind: input, shape index: {}]
  %s3 = inlined_call_operand.hbm [shape: f32[128,256], index: 3, kind: output, shape index: {}]
  %s4 = sld [smem:[#allocation0]]
  $region65: #{tpu_custom_call.1} parent=0
    _
  %s6 = ssub.s32 1, %s4
  %s7 = scalar_select 0, %s6, %s4
  $region1: #{tpu_custom_call.1} parent=0
    #allocation3 [shape = 'u8[65536]{0}', space=vmem, size = 0x10000, scoped, tag = 'input window, operand 0']
    #allocation4 [shape = 's32[2]{0}', space=sflag, size = 0x8, scoped, tag = 'scoped memory for tpu_custom_call.1']
    #allocation5 [shape = 's32[2]{0}', space=sflag, size = 0x8, scoped, tag = 'scoped memory for tpu_custom_call.1']
    #allocation6 [shape = 'u8[131072]{0}', space=vmem, size = 0x20000, scoped, tag = 'input window, operand 1, single buffered']
    #allocation7 [shape = 's32[1]{0}', space=sflag, size = 0x4, scoped, tag = 'scoped memory for tpu_custom_call.1']
    #allocation8 [shape = 'u8[1024]{0}', space=vmem, size = 0x400, scoped, tag = 'input window, operand 2, single buffered']
    #allocation9 [shape = 'u8[131072]{0}', space=vmem, size = 0x20000, scoped, tag = 'output window, operand 0']
    %8 = vsyncpa [#allocation4], 0
    %s9 = scalar_lea.sflag [#allocation4], 1
    %10 = vsyncpa %s9, 0
    %11 = vsyncpa [#allocation7], 0
    %12 = vsyncpa [#allocation5], 0
    %s13 = scalar_lea.sflag [#allocation5], 1
    %14 = vsyncpa %s13, 0
    loop: start=0, step=1, limit=4
    $region2: #{tpu_custom_call.1} parent=1 // loop_pre_header
      _
    $region3: #{tpu_custom_call.1} parent=1 // loop_header
      %s16 = sphi 0, %s20
      %p17 = scmp.ge.s32.totalorder %s16, 4
      %s23 = sphi 0, %s42
      %s24 = sphi 0, %s38
      %s25 = sphi 0, %s34
      %s26 = sphi 0, %s23
      %s27 = sphi 0, %s24
      %s28 = sphi 0, %s25
      %s29 = sphi 0, %s26
      %s30 = sphi 0, %s27
      %s31 = sphi 0, %s28
      %s47 = sphi 0, %s49
      %s50 = sphi 0, %s47
      %s51 = sphi 0, %s50
      %s67 = sphi 0, %s51
      %s75 = sphi 0, %s77
      %s78 = sphi 0, %s75
      %s79 = sphi 0, %s78
      %s95 = sphi 0, %s79
      %s101 = sphi 0, %s103
      %s104 = sphi 0, %s101
      %s105 = sphi 0, %s104
      %s121 = sphi 0, %s105
      %s129 = sphi 0, %s131
      %s132 = sphi 0, %s129
      %s133 = sphi 0, %s132
      %s149 = sphi 0, %s133
    $region4: #{tpu_custom_call.1} parent=1 // loop_header_branch
      %19 = sbr.rel (%p17) target = $region8
    $region5: #{tpu_custom_call.1} parent=1 // loop_body
      %s21 = ssub.s32 %s16, 1
      %s22 = ssub.s32 %s16, 2
      %s32 = sadd.s32 1, %s25
      %p33 = scmp.ge.s32.totalorder %s32, 1
      %s34 = scalar_select %p33, 0, %s32
      %s35 = sadd.s32 1, %s24
      %s36 = scalar_select %p33, %s35, %s24
      %p37 = scmp.ge.s32.totalorder %s36, 1
      %s38 = scalar_select %p37, 0, %s36
      %s39 = sadd.s32 1, %s23
      %s40 = scalar_select %p37, %s39, %s23
      %p41 = scmp.ge.s32.totalorder %s40, 2
      %s42 = scalar_select %p41, 0, %s40
      %s43 = ssub.s32 %s23, %s42
      %s44 = ssub.s32 %s25, %s34
      %s45 = sor.u32 %s43, %s44
      %p46 = scmp.eq.s32.totalorder %s45, 0
      %s48 = sadd.s32 %s47, 1
      %s49 = scalar_select %p46, %s47, %s48
      %p52 = pneg %p46
      %p53 = scmp.eq.s32.totalorder %s16, 1
      %p54 = por %p52, %p53
      %p55 = scmp.ne.s32.totalorder %s47, %s50
      %p56 = scmp.eq.s32.totalorder %s16, 0
      %p57 = por %p55, %p56
      %p58 = scmp.ne.s32.totalorder %s47, %s50
      %p59 = scmp.eq.s32.totalorder %s21, 1
      %p60 = por %p58, %p59
      %p61 = scmp.ne.s32.totalorder %s50, %s51
      %p62 = scmp.eq.s32.totalorder %s21, 0
      %p63 = por %p61, %p62
      %p64 = scmp.ne.s32.totalorder %s50, %s51
      %p65 = scmp.eq.s32.totalorder %s22, 1
      %p66 = por %p64, %p65
      %p68 = scmp.ne.s32.totalorder %s51, %s67
      %p69 = scmp.eq.s32.totalorder %s22, 0
      %p70 = por %p68, %p69
      %s71 = ssub.s32 %s25, %s34
      %s72 = ssub.s32 %s24, %s38
      %s73 = sor.u32 %s71, %s72
      %p74 = scmp.eq.s32.totalorder %s73, 0
      %s76 = sadd.s32 %s75, 1
      %s77 = scalar_select %p74, %s75, %s76
      %p80 = pneg %p74
      %p81 = scmp.eq.s32.totalorder %s16, 1
      %p82 = por %p80, %p81
      %p83 = scmp.ne.s32.totalorder %s75, %s78
      %p84 = scmp.eq.s32.totalorder %s16, 0
      %p85 = por %p83, %p84
      %p86 = scmp.ne.s32.totalorder %s75, %s78
      %p87 = scmp.eq.s32.totalorder %s21, 1
      %p88 = por %p86, %p87
      %p89 = scmp.ne.s32.totalorder %s78, %s79
      %p90 = scmp.eq.s32.totalorder %s21, 0
      %p91 = por %p89, %p90
      %p92 = scmp.ne.s32.totalorder %s78, %s79
      %p93 = scmp.eq.s32.totalorder %s22, 1
      %p94 = por %p92, %p93
      %p96 = scmp.ne.s32.totalorder %s79, %s95
      %p97 = scmp.eq.s32.totalorder %s22, 0
      %p98 = por %p96, %p97
      %s99 = ssub.s32 %s24, %s38
      %p100 = scmp.eq.s32.totalorder %s99, 0
      %s102 = sadd.s32 %s101, 1
      %s103 = scalar_select %p100, %s101, %s102
      %p106 = pneg %p100
      %p107 = scmp.eq.s32.totalorder %s16, 1
      %p108 = por %p106, %p107
      %p109 = scmp.ne.s32.totalorder %s101, %s104
      %p110 = scmp.eq.s32.totalorder %s16, 0
      %p111 = por %p109, %p110
      %p112 = scmp.ne.s32.totalorder %s101, %s104
      %p113 = scmp.eq.s32.totalorder %s21, 1
      %p114 = por %p112, %p113
      %p115 = scmp.ne.s32.totalorder %s104, %s105
      %p116 = scmp.eq.s32.totalorder %s21, 0
      %p117 = por %p115, %p116
      %p118 = scmp.ne.s32.totalorder %s104, %s105
      %p119 = scmp.eq.s32.totalorder %s22, 1
      %p120 = por %p118, %p119
      %p122 = scmp.ne.s32.totalorder %s105, %s121
      %p123 = scmp.eq.s32.totalorder %s22, 0
      %p124 = por %p122, %p123
      %s125 = ssub.s32 %s23, %s42
      %s126 = ssub.s32 %s24, %s38
      %s127 = sor.u32 %s125, %s126
      %p128 = scmp.eq.s32.totalorder %s127, 0
      %s130 = sadd.s32 %s129, 1
      %s131 = scalar_select %p128, %s129, %s130
      %p134 = pneg %p128
      %p135 = scmp.eq.s32.totalorder %s16, 1
      %p136 = por %p134, %p135
      %p137 = scmp.ne.s32.totalorder %s129, %s132
      %p138 = scmp.eq.s32.totalorder %s16, 0
      %p139 = por %p137, %p138
      %p140 = scmp.ne.s32.totalorder %s129, %s132
      %p141 = scmp.eq.s32.totalorder %s21, 1
      %p142 = por %p140, %p141
      %p143 = scmp.ne.s32.totalorder %s132, %s133
      %p144 = scmp.eq.s32.totalorder %s21, 0
      %p145 = por %p143, %p144
      %p146 = scmp.ne.s32.totalorder %s132, %s133
      %p147 = scmp.eq.s32.totalorder %s22, 1
      %p148 = por %p146, %p147
      %p150 = scmp.ne.s32.totalorder %s133, %s149
      %p151 = scmp.eq.s32.totalorder %s22, 0
      %p152 = por %p150, %p151
      %p153 = scmp.le.s32.totalorder 1, %s16
      %p154 = scmp.lt.s32.totalorder %s16, 3
      %p155 = pnand %p153, %p154
      %p156 = pneg %p155
      // Predicated region
      $region9: #{tpu_custom_call.1} parent=5 // pred_check
        _
      $region10: #{tpu_custom_call.1} parent=5 // pred_check_branch
        %158 = sbr.rel (%p155) target = $region12
      $region11: #{tpu_custom_call.1} parent=5 // pred_region
        %s159 = ssub.s32 %s16, 1
        // Predicated region
        $region13: #{tpu_custom_call.1} parent=11 // pred_check
          %p160 = pneg %p91
        $region14: #{tpu_custom_call.1} parent=11 // pred_check_branch
          %162 = sbr.rel (%p160) target = $region16
        $region15: #{tpu_custom_call.1} parent=11 // pred_region
          %s163 = smul.u32 32, %s28
          %s164 = smul.u32 2, %s27
          %166 = vsyncadd [#allocation7], 0
          %s167 = smul.addr %s163, 2
          %s168 = sadd.s32 %s164, %s167
          %s169 = smul.addr %s168, 4
          %s170 = scalar_lea.hbm %s1, %s169
          %s171 = sshll.u32 %s170, 4
          %s172 = int_to_ptr.hbm [resolvable:$true] %s171
          %s173 = sshll.u32 [#allocation6], 4
          %s174 = int_to_ptr.vmem [resolvable:$true] %s173
          %179 = dma.hbm_to_vmem [thread:$0]  %s172, 4096, %s174, [#allocation7], 128, 128, 8
        $region16: #{tpu_custom_call.1} parent=11 // pred_fallthru
          _
        // Predicated region
        $region17: #{tpu_custom_call.1} parent=11 // pred_check
          %p180 = pneg %p117
        $region18: #{tpu_custom_call.1} parent=11 // pred_check_branch
          %182 = sbr.rel (%p180) target = $region20
        $region19: #{tpu_custom_call.1} parent=11 // pred_region
          %s183 = smul.u32 2, %s27
          %185 = vsyncadd [#allocation7], 0
          %s186 = scalar_lea.hbm %s2, %s183
          %s188 = sshll.u32 %s186, 4
          %s189 = int_to_ptr.hbm [resolvable:$true] %s188
          %s190 = sshll.u32 [#allocation8], 4
          %s191 = int_to_ptr.vmem [resolvable:$true] %s190
          %193 = dma.hbm_to_vmem [thread:$0]  %s189, 32, %s191, [#allocation7]
        $region20: #{tpu_custom_call.1} parent=11 // pred_fallthru
          _
      $region12: #{tpu_custom_call.1} parent=5 // pred_fallthru
        _
      %p194 = scmp.lt.s32.totalorder %s16, 2
      // Predicated region
      $region21: #{tpu_custom_call.1} parent=5 // pred_check
        %p195 = pneg %p194
      $region22: #{tpu_custom_call.1} parent=5 // pred_check_branch
        %197 = sbr.rel (%p195) target = $region24
      $region23: #{tpu_custom_call.1} parent=5 // pred_region
        // Predicated region
        $region25: #{tpu_custom_call.1} parent=23 // pred_check
          %p198 = pneg %p57
        $region26: #{tpu_custom_call.1} parent=23 // pred_check_branch
          %200 = sbr.rel (%p198) target = $region28
        $region27: #{tpu_custom_call.1} parent=23 // pred_region
          %s201 = sand.u32 %s47, 1
          %s202 = scalar_lea.sflag [#allocation4], %s201
          %s203 = sand.u32 %s47, 1
          %s204 = smul.addr %s203, 64
          %s205 = scalar_lea.vmem [#allocation3], %s204
          %s206 = smul.u32 8, %s23
          %s207 = smul.u32 2, %s25
          %209 = vsyncadd %s202, 0
          %s210 = smul.addr %s206, 2
          %s211 = sadd.s32 %s207, %s210
          %s212 = smul.addr %s211, 4
          %s213 = scalar_lea.hbm %s0, %s212
          %s214 = sshll.u32 %s213, 4
          %s215 = int_to_ptr.hbm [resolvable:$true] %s214
          %s216 = sshll.u32 %s205, 4
          %s217 = int_to_ptr.vmem [resolvable:$true] %s216
          %222 = dma.hbm_to_vmem [thread:$0]  %s215, 1024, %s217, %s202, 128, 128, 8
        $region28: #{tpu_custom_call.1} parent=23 // pred_fallthru
          _
      $region24: #{tpu_custom_call.1} parent=5 // pred_fallthru
        _
      %p223 = scmp.le.s32.totalorder 1, %s16
      %p224 = scmp.lt.s32.totalorder %s16, 3
      %p225 = pnand %p223, %p224
      %p226 = pneg %p225
      // Predicated region
      $region29: #{tpu_custom_call.1} parent=5 // pred_check
        _
      $region30: #{tpu_custom_call.1} parent=5 // pred_check_branch
        %228 = sbr.rel (%p225) target = $region32
      $region31: #{tpu_custom_call.1} parent=5 // pred_region
        %s229 = ssub.s32 %s16, 1
        %s230 = sand.u32 %s50, 1
        %s231 = scalar_lea.sflag [#allocation4], %s230
        %s232 = sand.u32 %s50, 1
        %s233 = smul.addr %s232, 64
        %s234 = scalar_lea.vmem [#allocation3], %s233
        // Predicated region
        $region33: #{tpu_custom_call.1} parent=31 // pred_check
          %p235 = pneg %p63
        $region34: #{tpu_custom_call.1} parent=31 // pred_check_branch
          %237 = sbr.rel (%p235) target = $region36
        $region35: #{tpu_custom_call.1} parent=31 // pred_region
          %239 = dma.done %s231, 1024
        $region36: #{tpu_custom_call.1} parent=31 // pred_fallthru
          _
        // Predicated region
        $region37: #{tpu_custom_call.1} parent=31 // pred_check
          %p240 = pneg %p91
        $region38: #{tpu_custom_call.1} parent=31 // pred_check_branch
          %242 = sbr.rel (%p240) target = $region40
        $region39: #{tpu_custom_call.1} parent=31 // pred_region
          %244 = dma.done [#allocation7], 4096
        $region40: #{tpu_custom_call.1} parent=31 // pred_fallthru
          _
        // Predicated region
        $region41: #{tpu_custom_call.1} parent=31 // pred_check
          %p245 = pneg %p117
        $region42: #{tpu_custom_call.1} parent=31 // pred_check_branch
          %247 = sbr.rel (%p245) target = $region44
        $region43: #{tpu_custom_call.1} parent=31 // pred_region
          %249 = dma.done [#allocation7], 32
        $region44: #{tpu_custom_call.1} parent=31 // pred_fallthru
          _
        %s250 = sand.u32 %s50, 1
        %s251 = scalar_lea.sflag [#allocation4], %s250
        %s252 = sand.u32 %s50, 1
        %s253 = smul.addr %s252, 64
        %s254 = scalar_lea.vmem [#allocation3], %s253
        %p255 = pneg %p63
        %p256 = pneg %p60
        %p257 = pneg %p91
        %p258 = pneg %p88
        %p259 = pneg %p117
        %p260 = pneg %p114
        %p261 = pneg %p145
        %p262 = pneg %p142
        %s263 = sand.u32 %s132, 1
        %s264 = scalar_lea.sflag [#allocation5], %s263
        %s265 = sand.u32 %s132, 1
        %s266 = smul.addr %s265, 128
        %s267 = scalar_lea.vmem [#allocation9], %s266
        %s268 = smul.u32 8, %s26
        %s269 = smul.u32 2, %s28
        %s270 = smul.u32 32, %s28
        %s271 = smul.u32 2, %s27
        %s272 = smul.u32 2, %s27
        %s273 = smul.u32 8, %s26
        %s274 = smul.u32 2, %s27
        %p275 = scmp.eq.s32.totalorder %s28, 0
        // Predicated region
        $region45: #{tpu_custom_call.1} parent=31 // pred_check
          %p276 = pneg %p275
        $region46: #{tpu_custom_call.1} parent=31 // pred_check_branch
          %278 = sbr.rel (%p276) target = $region48
        $region47: #{tpu_custom_call.1} parent=31 // pred_region
          %279 = vst [vmem:[#allocation2] sm:$0xff] 0.0
          %280 = vst [vmem:[#allocation2 + $0x8] sm:$0xff] 0.0
          %281 = vst [vmem:[#allocation2 + $0x10] sm:$0xff] 0.0
          %282 = vst [vmem:[#allocation2 + $0x18] sm:$0xff] 0.0
          %283 = vst [vmem:[#allocation2 + $0x20] sm:$0xff] 0.0
          %284 = vst [vmem:[#allocation2 + $0x28] sm:$0xff] 0.0
          %285 = vst [vmem:[#allocation2 + $0x30] sm:$0xff] 0.0
          %286 = vst [vmem:[#allocation2 + $0x38] sm:$0xff] 0.0
          %287 = vst [vmem:[#allocation2 + $0x40] sm:$0xff] 0.0
          %288 = vst [vmem:[#allocation2 + $0x48] sm:$0xff] 0.0
          %289 = vst [vmem:[#allocation2 + $0x50] sm:$0xff] 0.0
          %290 = vst [vmem:[#allocation2 + $0x58] sm:$0xff] 0.0
          %291 = vst [vmem:[#allocation2 + $0x60] sm:$0xff] 0.0
          %292 = vst [vmem:[#allocation2 + $0x68] sm:$0xff] 0.0
          %293 = vst [vmem:[#allocation2 + $0x70] sm:$0xff] 0.0
          %294 = vst [vmem:[#allocation2 + $0x78] sm:$0xff] 0.0
        $region48: #{tpu_custom_call.1} parent=31 // pred_fallthru
          _
        %v295 = vld [vmem:[#allocation2] sm:$0xff]
        %v296 = vld [vmem:[#allocation2 + $0x8] sm:$0xff]
        %v297 = vld [vmem:[#allocation2 + $0x10] sm:$0xff]
        %v298 = vld [vmem:[#allocation2 + $0x18] sm:$0xff]
        %v299 = vld [vmem:[#allocation2 + $0x20] sm:$0xff]
        %v300 = vld [vmem:[#allocation2 + $0x28] sm:$0xff]
        %v301 = vld [vmem:[#allocation2 + $0x30] sm:$0xff]
        %v302 = vld [vmem:[#allocation2 + $0x38] sm:$0xff]
        %v303 = vld [vmem:[#allocation2 + $0x40] sm:$0xff]
        %v304 = vld [vmem:[#allocation2 + $0x48] sm:$0xff]
        %v305 = vld [vmem:[#allocation2 + $0x50] sm:$0xff]
        %v306 = vld [vmem:[#allocation2 + $0x58] sm:$0xff]
        %v307 = vld [vmem:[#allocation2 + $0x60] sm:$0xff]
        %v308 = vld [vmem:[#allocation2 + $0x68] sm:$0xff]
        %v309 = vld [vmem:[#allocation2 + $0x70] sm:$0xff]
        %v310 = vld [vmem:[#allocation2 + $0x78] sm:$0xff]
        %v311 = vld [vmem:[%s234] sm:$0xff]
        %v312 = vld [vmem:[%s234 + $0x8] sm:$0xff]
        %v313 = vld [vmem:[%s234 + $0x10] sm:$0xff]
        %v314 = vld [vmem:[%s234 + $0x18] sm:$0xff]
        %v315 = vld [vmem:[%s234 + $0x20] sm:$0xff]
        %v316 = vld [vmem:[%s234 + $0x28] sm:$0xff]
        %v317 = vld [vmem:[%s234 + $0x30] sm:$0xff]
        %v318 = vld [vmem:[%s234 + $0x38] sm:$0xff]
        %v319 = vld [vmem:[#allocation6] sm:$0xff]
        %v320 = vld [vmem:[#allocation6 + $0x8] sm:$0xff]
        %v321 = vld [vmem:[#allocation6 + $0x10] sm:$0xff]
        %v322 = vld [vmem:[#allocation6 + $0x18] sm:$0xff]
        %v323 = vld [vmem:[#allocation6 + $0x20] sm:$0xff]
        %v324 = vld [vmem:[#allocation6 + $0x28] sm:$0xff]
        %v325 = vld [vmem:[#allocation6 + $0x30] sm:$0xff]
        %v326 = vld [vmem:[#allocation6 + $0x38] sm:$0xff]
        %v327 = vld [vmem:[#allocation6 + $0x40] sm:$0xff]
        %v328 = vld [vmem:[#allocation6 + $0x48] sm:$0xff]
        %v329 = vld [vmem:[#allocation6 + $0x50] sm:$0xff]
        %v330 = vld [vmem:[#allocation6 + $0x58] sm:$0xff]
        %v331 = vld [vmem:[#allocation6 + $0x60] sm:$0xff]
        %v332 = vld [vmem:[#allocation6 + $0x68] sm:$0xff]
        %v333 = vld [vmem:[#allocation6 + $0x70] sm:$0xff]
        %v334 = vld [vmem:[#allocation6 + $0x78] sm:$0xff]
        %v335 = vld [vmem:[#allocation6 + $0x80] sm:$0xff]
        %v336 = vld [vmem:[#allocation6 + $0x88] sm:$0xff]
        %v337 = vld [vmem:[#allocation6 + $0x90] sm:$0xff]
        %v338 = vld [vmem:[#allocation6 + $0x98] sm:$0xff]
        %v339 = vld [vmem:[#allocation6 + $0xa0] sm:$0xff]
        %v340 = vld [vmem:[#allocation6 + $0xa8] sm:$0xff]
        %v341 = vld [vmem:[#allocation6 + $0xb0] sm:$0xff]
        %v342 = vld [vmem:[#allocation6 + $0xb8] sm:$0xff]
        %v343 = vld [vmem:[#allocation6 + $0xc0] sm:$0xff]
        %v344 = vld [vmem:[#allocation6 + $0xc8] sm:$0xff]
        %v345 = vld [vmem:[#allocation6 + $0xd0] sm:$0xff]
        %v346 = vld [vmem:[#allocation6 + $0xd8] sm:$0xff]
        %v347 = vld [vmem:[#allocation6 + $0xe0] sm:$0xff]
        %v348 = vld [vmem:[#allocation6 + $0xe8] sm:$0xff]
        %v349 = vld [vmem:[#allocation6 + $0xf0] sm:$0xff]
        %v350 = vld [vmem:[#allocation6 + $0xf8] sm:$0xff]
        %v359 = vunpack.c.l.b16 %v311
        %v360 = vunpack.c.h.b16 %v311
        %v361 = vunpack.c.l.b16 %v312
        %v362 = vunpack.c.h.b16 %v312
        %v363 = vunpack.c.l.b16 %v313
        %v364 = vunpack.c.h.b16 %v313
        %v365 = vunpack.c.l.b16 %v314
        %v366 = vunpack.c.h.b16 %v314
        %v367 = vunpack.c.l.b16 %v315
        %v368 = vunpack.c.h.b16 %v315
        %v369 = vunpack.c.l.b16 %v316
        %v370 = vunpack.c.h.b16 %v316
        %v371 = vunpack.c.l.b16 %v317
        %v372 = vunpack.c.h.b16 %v317
        %v373 = vunpack.c.l.b16 %v318
        %v374 = vunpack.c.h.b16 %v318
        %v375 = vpack.c.b16 %v361, %v359
        %v376 = vpack.c.b16 %v362, %v360
        %v377 = vpack.c.b16 %v365, %v363
        %v378 = vpack.c.b16 %v366, %v364
        %v379 = vpack.c.b16 %v369, %v367
        %v380 = vpack.c.b16 %v370, %v368
        %v381 = vpack.c.b16 %v373, %v371
        %v382 = vpack.c.b16 %v374, %v372
        %v423 = vunpack.c.l.b16 %v319
        %v424 = vunpack.c.h.b16 %v319
        %v425 = vunpack.c.l.b16 %v320
        %v426 = vunpack.c.h.b16 %v320
        %v427 = vunpack.c.l.b16 %v321
        %v428 = vunpack.c.h.b16 %v321
        %v429 = vunpack.c.l.b16 %v322
        %v430 = vunpack.c.h.b16 %v322
        %v431 = vunpack.c.l.b16 %v323
        %v432 = vunpack.c.h.b16 %v323
        %v433 = vunpack.c.l.b16 %v324
        %v434 = vunpack.c.h.b16 %v324
        %v435 = vunpack.c.l.b16 %v325
        %v436 = vunpack.c.h.b16 %v325
        %v437 = vunpack.c.l.b16 %v326
        %v438 = vunpack.c.h.b16 %v326
        %v439 = vunpack.c.l.b16 %v327
        %v440 = vunpack.c.h.b16 %v327
        %v441 = vunpack.c.l.b16 %v328
        %v442 = vunpack.c.h.b16 %v328
        %v443 = vunpack.c.l.b16 %v329
        %v444 = vunpack.c.h.b16 %v329
        %v445 = vunpack.c.l.b16 %v330
        %v446 = vunpack.c.h.b16 %v330
        %v447 = vunpack.c.l.b16 %v331
        %v448 = vunpack.c.h.b16 %v331
        %v449 = vunpack.c.l.b16 %v332
        %v450 = vunpack.c.h.b16 %v332
        %v451 = vunpack.c.l.b16 %v333
        %v452 = vunpack.c.h.b16 %v333
        %v453 = vunpack.c.l.b16 %v334
        %v454 = vunpack.c.h.b16 %v334
        %v455 = vunpack.c.l.b16 %v335
        %v456 = vunpack.c.h.b16 %v335
        %v457 = vunpack.c.l.b16 %v336
        %v458 = vunpack.c.h.b16 %v336
        %v459 = vunpack.c.l.b16 %v337
        %v460 = vunpack.c.h.b16 %v337
        %v461 = vunpack.c.l.b16 %v338
        %v462 = vunpack.c.h.b16 %v338
        %v463 = vunpack.c.l.b16 %v339
        %v464 = vunpack.c.h.b16 %v339
        %v465 = vunpack.c.l.b16 %v340
        %v466 = vunpack.c.h.b16 %v340
        %v467 = vunpack.c.l.b16 %v341
        %v468 = vunpack.c.h.b16 %v341
        %v469 = vunpack.c.l.b16 %v342
        %v470 = vunpack.c.h.b16 %v342
        %v471 = vunpack.c.l.b16 %v343
        %v472 = vunpack.c.h.b16 %v343
        %v473 = vunpack.c.l.b16 %v344
        %v474 = vunpack.c.h.b16 %v344
        %v475 = vunpack.c.l.b16 %v345
        %v476 = vunpack.c.h.b16 %v345
        %v477 = vunpack.c.l.b16 %v346
        %v478 = vunpack.c.h.b16 %v346
        %v479 = vunpack.c.l.b16 %v347
        %v480 = vunpack.c.h.b16 %v347
        %v481 = vunpack.c.l.b16 %v348
        %v482 = vunpack.c.h.b16 %v348
        %v483 = vunpack.c.l.b16 %v349
        %v484 = vunpack.c.h.b16 %v349
        %v485 = vunpack.c.l.b16 %v350
        %v486 = vunpack.c.h.b16 %v350
        %v487 = vpack.c.b16 %v425, %v423
        %v488 = vpack.c.b16 %v426, %v424
        %v489 = vpack.c.b16 %v429, %v427
        %v490 = vpack.c.b16 %v430, %v428
        %v491 = vpack.c.b16 %v433, %v431
        %v492 = vpack.c.b16 %v434, %v432
        %v493 = vpack.c.b16 %v437, %v435
        %v494 = vpack.c.b16 %v438, %v436
        %v495 = vpack.c.b16 %v441, %v439
        %v496 = vpack.c.b16 %v442, %v440
        %v497 = vpack.c.b16 %v445, %v443
        %v498 = vpack.c.b16 %v446, %v444
        %v499 = vpack.c.b16 %v449, %v447
        %v500 = vpack.c.b16 %v450, %v448
        %v501 = vpack.c.b16 %v453, %v451
        %v502 = vpack.c.b16 %v454, %v452
        %v503 = vpack.c.b16 %v457, %v455
        %v504 = vpack.c.b16 %v458, %v456
        %v505 = vpack.c.b16 %v461, %v459
        %v506 = vpack.c.b16 %v462, %v460
        %v507 = vpack.c.b16 %v465, %v463
        %v508 = vpack.c.b16 %v466, %v464
        %v509 = vpack.c.b16 %v469, %v467
        %v510 = vpack.c.b16 %v470, %v468
        %v511 = vpack.c.b16 %v473, %v471
        %v512 = vpack.c.b16 %v474, %v472
        %v513 = vpack.c.b16 %v477, %v475
        %v514 = vpack.c.b16 %v478, %v476
        %v515 = vpack.c.b16 %v481, %v479
        %v516 = vpack.c.b16 %v482, %v480
        %v517 = vpack.c.b16 %v485, %v483
        %v518 = vpack.c.b16 %v486, %v484
        %551 = vmatpush.bf16.msra.mxu0 %v501
        %552 = vmatpush.bf16.msra.mxu0 %v499
        %553 = vmatpush.bf16.msra.mxu0 %v497
        %554 = vmatpush.bf16.msra.mxu0 %v495
        %555 = vmatpush.bf16.msra.mxu0 %v493
        %556 = vmatpush.bf16.msra.mxu0 %v491
        %557 = vmatpush.bf16.msra.mxu0 %v489
        %558 = vmatpush.bf16.msra.mxu0 %v487
        %559 = vmatmul.bf16.gmra.mxu0 %v375
        %v560 = vpop.f32.mrf.mxu0
        %v561 = vadd.f32 0.0, %v560
        %v562 = vpop.f32.mrf.mxu0
        %v563 = vadd.f32 0.0, %v562
        %564 = vmatmul.bf16.gmra.mxu0 %v377
        %v565 = vpop.f32.mrf.mxu0
        %v566 = vadd.f32 0.0, %v565
        %v567 = vpop.f32.mrf.mxu0
        %v568 = vadd.f32 0.0, %v567
        %569 = vmatmul.bf16.gmra.mxu0 %v379
        %v570 = vpop.f32.mrf.mxu0
        %v571 = vadd.f32 0.0, %v570
        %v572 = vpop.f32.mrf.mxu0
        %v573 = vadd.f32 0.0, %v572
        %574 = vmatmul.bf16.gmra.mxu0 %v381
        %v575 = vpop.f32.mrf.mxu0
        %v576 = vadd.f32 0.0, %v575
        %v577 = vpop.f32.mrf.mxu0
        %v578 = vadd.f32 0.0, %v577
        %579 = vdwg.mxu0
        %580 = vmatpush.bf16.msra.mxu0 %v517
        %581 = vmatpush.bf16.msra.mxu0 %v515
        %582 = vmatpush.bf16.msra.mxu0 %v513
        %583 = vmatpush.bf16.msra.mxu0 %v511
        %584 = vmatpush.bf16.msra.mxu0 %v509
        %585 = vmatpush.bf16.msra.mxu0 %v507
        %586 = vmatpush.bf16.msra.mxu0 %v505
        %587 = vmatpush.bf16.msra.mxu0 %v503
        %588 = vmatmul.bf16.gmra.mxu0 %v376
        %v589 = vpop.f32.mrf.mxu0
        %v590 = vadd.f32 %v561, %v589
        %v591 = vpop.f32.mrf.mxu0
        %v592 = vadd.f32 %v563, %v591
        %593 = vmatmul.bf16.gmra.mxu0 %v378
        %v594 = vpop.f32.mrf.mxu0
        %v595 = vadd.f32 %v566, %v594
        %v596 = vpop.f32.mrf.mxu0
        %v597 = vadd.f32 %v568, %v596
        %598 = vmatmul.bf16.gmra.mxu0 %v380
        %v599 = vpop.f32.mrf.mxu0
        %v600 = vadd.f32 %v571, %v599
        %v601 = vpop.f32.mrf.mxu0
        %v602 = vadd.f32 %v573, %v601
        %603 = vmatmul.bf16.gmra.mxu0 %v382
        %v604 = vpop.f32.mrf.mxu0
        %v605 = vadd.f32 %v576, %v604
        %v606 = vpop.f32.mrf.mxu0
        %v607 = vadd.f32 %v578, %v606
        %608 = vdwg.mxu0
        %609 = vmatpush.bf16.msra.mxu0 %v502
        %610 = vmatpush.bf16.msra.mxu0 %v500
        %611 = vmatpush.bf16.msra.mxu0 %v498
        %612 = vmatpush.bf16.msra.mxu0 %v496
        %613 = vmatpush.bf16.msra.mxu0 %v494
        %614 = vmatpush.bf16.msra.mxu0 %v492
        %615 = vmatpush.bf16.msra.mxu0 %v490
        %616 = vmatpush.bf16.msra.mxu0 %v488
        %617 = vmatmul.bf16.gmra.mxu0 %v375
        %v618 = vpop.f32.mrf.mxu0
        %v619 = vadd.f32 0.0, %v618
        %v620 = vpop.f32.mrf.mxu0
        %v621 = vadd.f32 0.0, %v620
        %622 = vmatmul.bf16.gmra.mxu0 %v377
        %v623 = vpop.f32.mrf.mxu0
        %v624 = vadd.f32 0.0, %v623
        %v625 = vpop.f32.mrf.mxu0
        %v626 = vadd.f32 0.0, %v625
        %627 = vmatmul.bf16.gmra.mxu0 %v379
        %v628 = vpop.f32.mrf.mxu0
        %v629 = vadd.f32 0.0, %v628
        %v630 = vpop.f32.mrf.mxu0
        %v631 = vadd.f32 0.0, %v630
        %632 = vmatmul.bf16.gmra.mxu0 %v381
        %v633 = vpop.f32.mrf.mxu0
        %v634 = vadd.f32 0.0, %v633
        %v635 = vpop.f32.mrf.mxu0
        %v636 = vadd.f32 0.0, %v635
        %637 = vdwg.mxu0
        %638 = vmatpush.bf16.msra.mxu0 %v518
        %639 = vmatpush.bf16.msra.mxu0 %v516
        %640 = vmatpush.bf16.msra.mxu0 %v514
        %641 = vmatpush.bf16.msra.mxu0 %v512
        %642 = vmatpush.bf16.msra.mxu0 %v510
        %643 = vmatpush.bf16.msra.mxu0 %v508
        %644 = vmatpush.bf16.msra.mxu0 %v506
        %645 = vmatpush.bf16.msra.mxu0 %v504
        %646 = vmatmul.bf16.gmra.mxu0 %v376
        %v647 = vpop.f32.mrf.mxu0
        %v648 = vadd.f32 %v619, %v647
        %v649 = vpop.f32.mrf.mxu0
        %v650 = vadd.f32 %v621, %v649
        %651 = vmatmul.bf16.gmra.mxu0 %v378
        %v652 = vpop.f32.mrf.mxu0
        %v653 = vadd.f32 %v624, %v652
        %v654 = vpop.f32.mrf.mxu0
        %v655 = vadd.f32 %v626, %v654
        %656 = vmatmul.bf16.gmra.mxu0 %v380
        %v657 = vpop.f32.mrf.mxu0
        %v658 = vadd.f32 %v629, %v657
        %v659 = vpop.f32.mrf.mxu0
        %v660 = vadd.f32 %v631, %v659
        %661 = vmatmul.bf16.gmra.mxu0 %v382
        %v662 = vpop.f32.mrf.mxu0
        %v663 = vadd.f32 %v634, %v662
        %v664 = vpop.f32.mrf.mxu0
        %v665 = vadd.f32 %v636, %v664
        %666 = vdwg.mxu0
        %v667 = vadd.f32 %v295, %v590
        %v668 = vadd.f32 %v296, %v648
        %v669 = vadd.f32 %v297, %v592
        %v670 = vadd.f32 %v298, %v650
        %v671 = vadd.f32 %v299, %v595
        %v672 = vadd.f32 %v300, %v653
        %v673 = vadd.f32 %v301, %v597
        %v674 = vadd.f32 %v302, %v655
        %v675 = vadd.f32 %v303, %v600
        %v676 = vadd.f32 %v304, %v658
        %v677 = vadd.f32 %v305, %v602
        %v678 = vadd.f32 %v306, %v660
        %v679 = vadd.f32 %v307, %v605
        %v680 = vadd.f32 %v308, %v663
        %v681 = vadd.f32 %v309, %v607
        %v682 = vadd.f32 %v310, %v665
        %683 = vst [vmem:[#allocation2] sm:$0xff] %v667
        %684 = vst [vmem:[#allocation2 + $0x8] sm:$0xff] %v668
        %685 = vst [vmem:[#allocation2 + $0x10] sm:$0xff] %v669
        %686 = vst [vmem:[#allocation2 + $0x18] sm:$0xff] %v670
        %687 = vst [vmem:[#allocation2 + $0x20] sm:$0xff] %v671
        %688 = vst [vmem:[#allocation2 + $0x28] sm:$0xff] %v672
        %689 = vst [vmem:[#allocation2 + $0x30] sm:$0xff] %v673
        %690 = vst [vmem:[#allocation2 + $0x38] sm:$0xff] %v674
        %691 = vst [vmem:[#allocation2 + $0x40] sm:$0xff] %v675
        %692 = vst [vmem:[#allocation2 + $0x48] sm:$0xff] %v676
        %693 = vst [vmem:[#allocation2 + $0x50] sm:$0xff] %v677
        %694 = vst [vmem:[#allocation2 + $0x58] sm:$0xff] %v678
        %695 = vst [vmem:[#allocation2 + $0x60] sm:$0xff] %v679
        %696 = vst [vmem:[#allocation2 + $0x68] sm:$0xff] %v680
        %697 = vst [vmem:[#allocation2 + $0x70] sm:$0xff] %v681
        %698 = vst [vmem:[#allocation2 + $0x78] sm:$0xff] %v682
        // Predicated region
        $region49: #{tpu_custom_call.1} parent=31 // pred_check
          %p699 = pneg %p275
        $region50: #{tpu_custom_call.1} parent=31 // pred_check_branch
          %701 = sbr.rel (%p699) target = $region52
        $region51: #{tpu_custom_call.1} parent=31 // pred_region
          %v702 = vld [vmem:[#allocation2] sm:$0xff]
          %v703 = vld [vmem:[#allocation2 + $0x8] sm:$0xff]
          %v704 = vld [vmem:[#allocation2 + $0x10] sm:$0xff]
          %v705 = vld [vmem:[#allocation2 + $0x18] sm:$0xff]
          %v706 = vld [vmem:[#allocation2 + $0x20] sm:$0xff]
          %v707 = vld [vmem:[#allocation2 + $0x28] sm:$0xff]
          %v708 = vld [vmem:[#allocation2 + $0x30] sm:$0xff]
          %v709 = vld [vmem:[#allocation2 + $0x38] sm:$0xff]
          %v710 = vld [vmem:[#allocation2 + $0x40] sm:$0xff]
          %v711 = vld [vmem:[#allocation2 + $0x48] sm:$0xff]
          %v712 = vld [vmem:[#allocation2 + $0x50] sm:$0xff]
          %v713 = vld [vmem:[#allocation2 + $0x58] sm:$0xff]
          %v714 = vld [vmem:[#allocation2 + $0x60] sm:$0xff]
          %v715 = vld [vmem:[#allocation2 + $0x68] sm:$0xff]
          %v716 = vld [vmem:[#allocation2 + $0x70] sm:$0xff]
          %v717 = vld [vmem:[#allocation2 + $0x78] sm:$0xff]
          %v718 = vld [vmem:[#allocation8] sm:$0x3]
          %v720 = vperm.slane %v718, 0
          %v721 = vperm.slane %v718, 1
          %v724 = vadd.f32 %v702, %v720
          %v725 = vadd.f32 %v703, %v721
          %v726 = vadd.f32 %v704, %v720
          %v727 = vadd.f32 %v705, %v721
          %v728 = vadd.f32 %v706, %v720
          %v729 = vadd.f32 %v707, %v721
          %v730 = vadd.f32 %v708, %v720
          %v731 = vadd.f32 %v709, %v721
          %v732 = vadd.f32 %v710, %v720
          %v733 = vadd.f32 %v711, %v721
          %v734 = vadd.f32 %v712, %v720
          %v735 = vadd.f32 %v713, %v721
          %v736 = vadd.f32 %v714, %v720
          %v737 = vadd.f32 %v715, %v721
          %v738 = vadd.f32 %v716, %v720
          %v739 = vadd.f32 %v717, %v721
          %v740 = vmax.f32 %v724, 0.0
          %v741 = vmax.f32 %v725, 0.0
          %v742 = vmax.f32 %v726, 0.0
          %v743 = vmax.f32 %v727, 0.0
          %v744 = vmax.f32 %v728, 0.0
          %v745 = vmax.f32 %v729, 0.0
          %v746 = vmax.f32 %v730, 0.0
          %v747 = vmax.f32 %v731, 0.0
          %v748 = vmax.f32 %v732, 0.0
          %v749 = vmax.f32 %v733, 0.0
          %v750 = vmax.f32 %v734, 0.0
          %v751 = vmax.f32 %v735, 0.0
          %v752 = vmax.f32 %v736, 0.0
          %v753 = vmax.f32 %v737, 0.0
          %v754 = vmax.f32 %v738, 0.0
          %v755 = vmax.f32 %v739, 0.0
          %756 = vst [vmem:[%s267] sm:$0xff] %v740
          %757 = vst [vmem:[%s267 + $0x8] sm:$0xff] %v741
          %758 = vst [vmem:[%s267 + $0x10] sm:$0xff] %v742
          %759 = vst [vmem:[%s267 + $0x18] sm:$0xff] %v743
          %760 = vst [vmem:[%s267 + $0x20] sm:$0xff] %v744
          %761 = vst [vmem:[%s267 + $0x28] sm:$0xff] %v745
          %762 = vst [vmem:[%s267 + $0x30] sm:$0xff] %v746
          %763 = vst [vmem:[%s267 + $0x38] sm:$0xff] %v747
          %764 = vst [vmem:[%s267 + $0x40] sm:$0xff] %v748
          %765 = vst [vmem:[%s267 + $0x48] sm:$0xff] %v749
          %766 = vst [vmem:[%s267 + $0x50] sm:$0xff] %v750
          %767 = vst [vmem:[%s267 + $0x58] sm:$0xff] %v751
          %768 = vst [vmem:[%s267 + $0x60] sm:$0xff] %v752
          %769 = vst [vmem:[%s267 + $0x68] sm:$0xff] %v753
          %770 = vst [vmem:[%s267 + $0x70] sm:$0xff] %v754
          %771 = vst [vmem:[%s267 + $0x78] sm:$0xff] %v755
        $region52: #{tpu_custom_call.1} parent=31 // pred_fallthru
          _
        %s772 = sand.u32 %s132, 1
        %s773 = scalar_lea.sflag [#allocation5], %s772
        %s774 = sand.u32 %s132, 1
        %s775 = smul.addr %s774, 128
        %s776 = scalar_lea.vmem [#allocation9], %s775
        // Predicated region
        $region53: #{tpu_custom_call.1} parent=31 // pred_check
          %p777 = pneg %p142
        $region54: #{tpu_custom_call.1} parent=31 // pred_check_branch
          %779 = sbr.rel (%p777) target = $region56
        $region55: #{tpu_custom_call.1} parent=31 // pred_region
          %s780 = smul.u32 8, %s26
          %s781 = smul.u32 2, %s27
          %783 = vsyncadd %s773, 0
          %s784 = smul.addr %s780, 2
          %s785 = sadd.s32 %s781, %s784
          %s786 = smul.addr %s785, 8
          %s787 = scalar_lea.hbm %s3, %s786
          %s788 = sshll.u32 %s776, 4
          %s789 = int_to_ptr.vmem [resolvable:$true] %s788
          %s790 = sshll.u32 %s787, 4
          %s791 = int_to_ptr.hbm [resolvable:$true] %s790
          %796 = dma.vmem_to_hbm [thread:$0]  %s789, 2048, %s791, %s773, 256, 256, 16
        $region56: #{tpu_custom_call.1} parent=31 // pred_fallthru
          _
      $region32: #{tpu_custom_call.1} parent=5 // pred_fallthru
        _
      %p797 = scmp.le.s32.totalorder 2, %s16
      // Predicated region
      $region57: #{tpu_custom_call.1} parent=5 // pred_check
        %p798 = pneg %p797
      $region58: #{tpu_custom_call.1} parent=5 // pred_check_branch
        %800 = sbr.rel (%p798) target = $region60
      $region59: #{tpu_custom_call.1} parent=5 // pred_region
        %s801 = ssub.s32 %s16, 2
        // Predicated region
        $region61: #{tpu_custom_call.1} parent=59 // pred_check
          %p802 = pneg %p148
        $region62: #{tpu_custom_call.1} parent=59 // pred_check_branch
          %804 = sbr.rel (%p802) target = $region64
        $region63: #{tpu_custom_call.1} parent=59 // pred_region
          %s805 = sand.u32 %s133, 1
          %s806 = scalar_lea.sflag [#allocation5], %s805
          %s807 = sand.u32 %s133, 1
          %s808 = smul.addr %s807, 128
          %s809 = scalar_lea.vmem [#allocation9], %s808
          %811 = dma.done %s806, 2048
        $region64: #{tpu_custom_call.1} parent=59 // pred_fallthru
          _
      $region60: #{tpu_custom_call.1} parent=5 // pred_fallthru
        _
    $region6: #{tpu_custom_call.1} parent=1 // loop_footer
      %s20 = sadd.s32 1, %s16
    $region7: #{tpu_custom_call.1} parent=1 // loop_footer_branch
      %15 = sbr.rel target = $region3
    $region8: #{tpu_custom_call.1} parent=1 // loop_exit
      _
    %812 = vsyncpa [#allocation4], 1
    %s813 = scalar_lea.sflag [#allocation4], 1
    %814 = vsyncpa %s813, 1
    %815 = vsyncpa [#allocation7], 1
    %816 = vsyncpa [#allocation5], 1
    %s817 = scalar_lea.sflag [#allocation5], 1
    %818 = vsyncpa %s817, 1

</llo_original>
